<compile_context>
chip_gen: v7x
topology: tpu7x:2x2x1
jax: 0.10.0
libtpu: 0.0.40
codegen_flags: <defaults>
</compile_context>

<pallas_src>
import functools

import jax
import jax.numpy as jnp
from jax.experimental import pallas as pl
from jax.experimental.pallas import tpu as pltpu


# ---------------------------------------------------------------------------
# Helpers
# ---------------------------------------------------------------------------

def _round_up(x: int, m: int) -> int:
    return ((x + m - 1) // m) * m


def _pad2(a, rows: int, cols: int):
    r, c = a.shape
    if r == rows and c == cols:
        return a
    return jnp.pad(a, ((0, rows - r), (0, cols - c)))


def _balanced_tile(dim: int, cap: int, align: int) -> int:
    """Split dim into ceil(dim/cap) roughly-equal tiles, then round the tile up to align.

    Avoids padding blow-up for sizes just over a cap (e.g. M=300, cap=512 -> tile 304,
    not 512), while never exceeding the cap by more than one alignment unit.
    """
    n_tiles = max(1, -(-dim // cap))
    t = -(-dim // n_tiles)
    return _round_up(max(t, 1), align)


@functools.lru_cache(maxsize=1)
def _vmem_capacity_bytes() -> int:
    try:
        info = pltpu.get_tpu_info()
        cap = getattr(info, "vmem_capacity_bytes", None)
        if cap:
            return int(cap)
    except Exception:
        pass
    return 64 * 1024 * 1024  # conservative default (v7x per-TC VMEM)


def _hw_tiling_defaults():
    """(tm_cap, tn_cap, tk_cap, vmem_limit_bytes) chosen per TPU generation."""
    cap = _vmem_capacity_bytes()
    if cap >= 100 * 1024 * 1024:
        # v5e / v6e: 128 MiB physical VMEM -> larger tiles, higher scoped limit.
        return 1024, 2048, 1024, 96 * 1024 * 1024
    # v7x (64 MiB per TC) or unknown: keep headroom under the per-TC budget.
    return 512, 1024, 1024, 48 * 1024 * 1024


# ---------------------------------------------------------------------------
# Kernel factory
# ---------------------------------------------------------------------------

def _make_kernel(have_bias: bool, in_kernel_mask: bool, compute_bf16: bool):
    """Builds a matmul kernel; the output block (k-invariant) is the accumulator."""

    def kernel(*refs):
        pos = 0
        x_ref = refs[pos]; pos += 1
        w_ref = refs[pos]; pos += 1
        if in_kernel_mask:
            wm_ref = refs[pos]; pos += 1
        if have_bias:
            b_ref = refs[pos]; pos += 1
        o_ref = refs[pos]

        k = pl.program_id(2)

        @pl.when(k == 0)
        def _init():
            o_ref[...] = jnp.zeros_like(o_ref)

        w = w_ref[...]
        if in_kernel_mask:
            # Apply pruning mask on the VPU (cast back to weight dtype if mask is int8).
            w = w * wm_ref[...].astype(w.dtype)
        xv = x_ref[...]
        if compute_bf16:
            xv = xv.astype(jnp.bfloat16)
            w = w.astype(jnp.bfloat16)

        # Contract K of BOTH operands (x: (tm,tk), w: (tn,tk)) -> (tm,tn); no transpose.
        o_ref[...] += jax.lax.dot_general(
            xv, w,
            dimension_numbers=(((1,), (1,)), ((), ())),
            preferred_element_type=jnp.float32,
        )

        if have_bias:
            @pl.when(k == pl.num_programs(2) - 1)
            def _epilogue():
                o_ref[...] += b_ref[...].astype(o_ref.dtype)   # (1,tn) broadcasts over tm

    return kernel


# ---------------------------------------------------------------------------
# Wrapper
# ---------------------------------------------------------------------------

@functools.partial(
    jax.jit,
    static_argnames=("premask_threshold", "assume_binary_mask", "use_bf16_compute",
                     "tm_max", "tn_max", "tk_max"),
)
def sparse_linear(x, weight, weight_mask, bias=None, bias_mask=None, *,
                  premask_threshold: int = 8,
                  assume_binary_mask: bool = False,
                  use_bf16_compute: bool = False,
                  tm_max=None, tn_max=None, tk_max=None):
    """y = x @ (weight * weight_mask).T + bias * bias_mask

    x:            (..., K)  float32
    weight:       (N, K)    float32
    weight_mask:  (N, K)    float32 pruning mask
    bias:         (N,)      float32 or None
    bias_mask:    (N,)      float32 or None
    returns:      (..., N)  float32
    """
    x = jnp.asarray(x, jnp.float32)
    weight = jnp.asarray(weight, jnp.float32)
    weight_mask = jnp.asarray(weight_mask, jnp.float32)

    # F.linear supports arbitrary leading dims; flatten to 2-D for the kernel.
    orig_shape = x.shape
    x2 = x.reshape(1, -1) if x.ndim == 1 else x.reshape(-1, x.shape[-1])

    M, K = x2.shape
    N, K2 = weight.shape
    assert K == K2, "in_features mismatch"

    have_bias = bias is not None
    if have_bias:
        bias = jnp.asarray(bias, jnp.float32)
        bm = jnp.ones_like(bias) if bias_mask is None else jnp.asarray(bias_mask, jnp.float32)
        pruned_bias = bias * bm            # pre-multiplied once: single (1,Np) stream

    # --- tiling ------------------------------------------------------------
    hw_tm, hw_tn, hw_tk, vmem_limit = _hw_tiling_defaults()
    tm_cap = tm_max or hw_tm
    tn_cap = tn_max or hw_tn
    tk_cap = tk_max or hw_tk

    tm = _balanced_tile(M, tm_cap, 8)       # sublane-aligned
    tn = _balanced_tile(N, tn_cap, 128)     # lane-dense stores / full MXU lanes
    tk = _balanced_tile(K, tk_cap, 128)
    Mp, Np, Kp = _round_up(M, tm), _round_up(N, tn), _round_up(K, tk)

    # Megacore (v7x): make sure at least one *parallel* axis has >=2 tiles when possible.
    if Mp // tm == 1 and Np // tn == 1:
        if tn >= 256 and (tn // 2) % 128 == 0 and N > tn // 2:
            tn //= 2
            Np = _round_up(N, tn)
        elif tm >= 16 and M > tm // 2:
            tm = _round_up(tm // 2, 8)
            Mp = _round_up(M, tm)

    n_i, n_j, n_k = Mp // tm, Np // tn, Kp // tk
    grid = (n_i, n_j, n_k)

    # Pre-mask the weight in the wrapper when the kernel would re-read it many times;
    # keep in-kernel masking only for small M (weight stream read <= premask_threshold x).
    in_kernel_mask = n_i <= premask_threshold

    # --- operands ----------------------------------------------------------
    xp = _pad2(x2, Mp, Kp)
    if in_kernel_mask:
        wp = _pad2(weight, Np, Kp)
        # int8 mask is lossless only for {0,1} masks; default keeps exact f32 semantics.
        mask_dtype = jnp.int8 if assume_binary_mask else jnp.float32
        wmp = _pad2(weight_mask, Np, Kp).astype(mask_dtype)
    else:
        wp = _pad2(weight * weight_mask, Np, Kp)   # one fused XLA pass, no mask stream

    x_spec = pl.BlockSpec((tm, tk), lambda i, j, k: (i, k))
    w_spec = pl.BlockSpec((tn, tk), lambda i, j, k: (j, k))
    o_spec = pl.BlockSpec((tm, tn), lambda i, j, k: (i, j))   # k-invariant accumulator
    b_spec = pl.BlockSpec((1, tn), lambda i, j, k: (0, j))    # K-invariant, stays resident

    in_specs = [x_spec, w_spec]
    inputs = [xp, wp]
    if in_kernel_mask:
        in_specs.append(w_spec)
        inputs.append(wmp)
    if have_bias:
        bp = _pad2(pruned_bias.reshape(1, N), 1, Np)
        in_specs.append(b_spec)
        inputs.append(bp)

    # --- cost / compiler params ---------------------------------------------
    mask_bytes = (Np * Kp * wmp.dtype.itemsize * n_i) if in_kernel_mask else 0
    cost = pl.CostEstimate(
        flops=2 * M * N * K,
        transcendentals=0,
        bytes_accessed=(Mp * Kp * 4 * n_j            # x re-read per N tile
                        + Np * Kp * 4 * n_i          # weight re-read per M tile
                        + mask_bytes
                        + (Np * 4 if have_bias else 0)
                        + Mp * Np * 4),
    )
    cparams = pltpu.CompilerParams(
        dimension_semantics=("parallel", "parallel", "arbitrary"),
        vmem_limit_bytes=vmem_limit,
    )

    kernel = _make_kernel(have_bias, in_kernel_mask, use_bf16_compute)

    out = pl.pallas_call(
        kernel,
        out_shape=jax.ShapeDtypeStruct((Mp, Np), jnp.float32),
        grid_spec=pltpu.PrefetchScalarGridSpec(
            num_scalar_prefetch=0,
            grid=grid,
            in_specs=in_specs,
            out_specs=o_spec,
        ),
        compiler_params=cparams,
        cost_estimate=cost,
    )(*inputs)

    out = out[:M, :N]
    if x.ndim == 1:
        return out.reshape((N,))
    return out.reshape(orig_shape[:-1] + (N,))


# ---------------------------------------------------------------------------
# Demo / correctness check
# ---------------------------------------------------------------------------

if __name__ == "__main__":
    key = jax.random.PRNGKey(0)
    k_x, k_w, k_b, k_m = jax.random.split(key, 4)

    batch = 8
    in_features = 32
    out_features = 16

    x = jax.random.normal(k_x, (batch, in_features), dtype=jnp.float32)
    weight = jax.random.normal(k_w, (out_features, in_features), dtype=jnp.float32)
    bias = jax.random.normal(k_b, (out_features,), dtype=jnp.float32)

    # Non-trivial binary pruning mask to exercise the masking path.
    weight_mask = (
        jax.random.uniform(k_m, (out_features, in_features)) > 0.5
    ).astype(jnp.float32)
    bias_mask = jnp.ones((out_features,), dtype=jnp.float32)

    y_ref = x @ (weight * weight_mask).T + (bias * bias_mask)[None, :]

    # 1) In-kernel mask path with bias (small M -> mask applied inside the kernel).
    y = jax.block_until_ready(sparse_linear(x, weight, weight_mask, bias, bias_mask))
    assert y.shape == (batch, out_features)
    assert jnp.allclose(y, y_ref, atol=1e-4, rtol=1e-4), "mismatch vs reference (bias)"

    # 2) No-bias path.
    y_nb = jax.block_until_ready(sparse_linear(x, weight, weight_mask))
    y_nb_ref = x @ (weight * weight_mask).T
    assert jnp.allclose(y_nb, y_nb_ref, atol=1e-4, rtol=1e-4), "mismatch vs reference (no bias)"

    # 3) Pre-masked-weight path (large-M specialization), exercised at small shapes by
    #    lowering the threshold.
    y_pm = jax.block_until_ready(
        sparse_linear(x, weight, weight_mask, bias, bias_mask, premask_threshold=0))
    assert jnp.allclose(y_pm, y_ref, atol=1e-4, rtol=1e-4), "mismatch vs reference (premask)"

    print("KERNEL_OK")
</pallas_src>

<mosaic_0001>
module attributes {stable_mosaic.version = 11 : i64} {
  func.func @kernel(%arg0: i32, %arg1: i32, %arg2: i32, %arg3: memref<8x128xf32, #tpu.memory_space<vmem>>, %arg4: memref<128x128xf32, #tpu.memory_space<vmem>>, %arg5: memref<128x128xf32, #tpu.memory_space<vmem>>, %arg6: memref<1x128xf32, #tpu.memory_space<vmem>>, %arg7: memref<8x128xf32, #tpu.memory_space<vmem>>) attributes {dimension_semantics = [#tpu.dimension_semantics<parallel>, #tpu.dimension_semantics<parallel>, #tpu.dimension_semantics<arbitrary>], iteration_bounds = array<i64: 1, 1, 1>, scalar_prefetch = 0 : i64, scratch_operands = 0 : i64, tpu.core_type = #tpu.core_type<tc>, window_params = [{transform_indices = @transform_0, window_bounds = array<i64: 8, 128>}, {transform_indices = @transform_1, window_bounds = array<i64: 128, 128>}, {transform_indices = @transform_2, window_bounds = array<i64: 128, 128>}, {transform_indices = @transform_3, window_bounds = array<i64: 1, 128>}, {transform_indices = @transform_4, window_bounds = array<i64: 8, 128>}]} {
    %c0_i32 = arith.constant 0 : i32
    %0 = arith.cmpi eq, %arg2, %c0_i32 : i32
    %1 = arith.extui %0 : i1 to i32
    %c0_i32_0 = arith.constant 0 : i32
    %2 = arith.cmpi ne, %1, %c0_i32_0 : i32
    scf.if %2 {
      %cst_12 = arith.constant 0.000000e+00 : f32
      %14 = vector.broadcast %cst_12 : f32 to vector<8x128xf32>
      %c0_13 = arith.constant 0 : index
      %c0_14 = arith.constant 0 : index
      %15 = vector.load %arg7[%c0_13, %c0_14] : memref<8x128xf32, #tpu.memory_space<vmem>>, vector<8x128xf32>
      tpu.vector_store %arg7[%c0_13, %c0_14], %14 {strides = array<i32>} : memref<8x128xf32, #tpu.memory_space<vmem>>, vector<8x128xf32>,
    } else {
    }
    %c0 = arith.constant 0 : index
    %c0_1 = arith.constant 0 : index
    %3 = vector.load %arg4[%c0, %c0_1] : memref<128x128xf32, #tpu.memory_space<vmem>>, vector<128x128xf32>
    %c0_2 = arith.constant 0 : index
    %c0_3 = arith.constant 0 : index
    %4 = vector.load %arg5[%c0_2, %c0_3] : memref<128x128xf32, #tpu.memory_space<vmem>>, vector<128x128xf32>
    %5 = arith.mulf %3, %4 : vector<128x128xf32>
    %c0_4 = arith.constant 0 : index
    %c0_5 = arith.constant 0 : index
    %6 = vector.load %arg3[%c0_4, %c0_5] : memref<8x128xf32, #tpu.memory_space<vmem>>, vector<8x128xf32>
    %c0_6 = arith.constant 0 : index
    %c0_7 = arith.constant 0 : index
    %7 = vector.load %arg7[%c0_6, %c0_7] : memref<8x128xf32, #tpu.memory_space<vmem>>, vector<8x128xf32>
    %cst = arith.constant dense<0.000000e+00> : vector<8x128xf32>
    %8 = tpu.matmul %6, %5, %cst {dimension_numbers = #tpu.dot_dimension_numbers<[1], [1], [0], [0], [0, 0, 1, 0], [], []>} : vector<8x128xf32>, vector<128x128xf32>, vector<8x128xf32> -> vector<8x128xf32>
    %9 = arith.addf %7, %8 : vector<8x128xf32>
    %c0_8 = arith.constant 0 : index
    %c0_9 = arith.constant 0 : index
    %10 = vector.load %arg7[%c0_8, %c0_9] : memref<8x128xf32, #tpu.memory_space<vmem>>, vector<8x128xf32>
    tpu.vector_store %arg7[%c0_8, %c0_9], %9 {strides = array<i32>} : memref<8x128xf32, #tpu.memory_space<vmem>>, vector<8x128xf32>,
    %c0_i32_10 = arith.constant 0 : i32
    %11 = arith.cmpi eq, %arg2, %c0_i32_10 : i32
    %12 = arith.extui %11 : i1 to i32
    %c0_i32_11 = arith.constant 0 : i32
    %13 = arith.cmpi ne, %12, %c0_i32_11 : i32
    scf.if %13 {
      %c0_12 = arith.constant 0 : index
      %c0_13 = arith.constant 0 : index
      %14 = vector.load %arg7[%c0_12, %c0_13] : memref<8x128xf32, #tpu.memory_space<vmem>>, vector<8x128xf32>
      %c0_14 = arith.constant 0 : index
      %c0_15 = arith.constant 0 : index
      %15 = vector.load %arg6[%c0_14, %c0_15] : memref<1x128xf32, #tpu.memory_space<vmem>>, vector<1x128xf32>
      %16 = vector.broadcast %15 : vector<1x128xf32> to vector<8x128xf32>
      %17 = arith.addf %14, %16 : vector<8x128xf32>
      %c0_16 = arith.constant 0 : index
      %c0_17 = arith.constant 0 : index
      %18 = vector.load %arg7[%c0_16, %c0_17] : memref<8x128xf32, #tpu.memory_space<vmem>>, vector<8x128xf32>
      tpu.vector_store %arg7[%c0_16, %c0_17], %17 {strides = array<i32>} : memref<8x128xf32, #tpu.memory_space<vmem>>, vector<8x128xf32>,
    } else {
    }
    return
  }
  func.func @transform_0(%arg0: i32, %arg1: i32, %arg2: i32) -> (i32, i32) {
    %c0_i32 = arith.constant 0 : i32
    return %arg0, %arg2 : i32, i32
  }
  func.func @transform_1(%arg0: i32, %arg1: i32, %arg2: i32) -> (i32, i32) {
    %c0_i32 = arith.constant 0 : i32
    return %arg1, %arg2 : i32, i32
  }
  func.func @transform_2(%arg0: i32, %arg1: i32, %arg2: i32) -> (i32, i32) {
    %c0_i32 = arith.constant 0 : i32
    return %arg1, %arg2 : i32, i32
  }
  func.func @transform_3(%arg0: i32, %arg1: i32, %arg2: i32) -> (i32, i32) {
    %c0_i32 = arith.constant 0 : i32
    %c0_i32_0 = arith.constant 0 : i32
    return %c0_i32, %arg1 : i32, i32
  }
  func.func @transform_4(%arg0: i32, %arg1: i32, %arg2: i32) -> (i32, i32) {
    %c0_i32 = arith.constant 0 : i32
    return %arg0, %arg1 : i32, i32
  }
}

</mosaic_0001>

<llo_original>
// kernel: sparse_linear.1
$region0: #{sparse_linear.1}
  #allocation0 [shape = 'u32[]', space=smem, size = 0x4, offset = 0x4, fixed_abs, tag = 'smem constant byte address 0x4 - core index']
  #allocation1 [shape = 'u32[144,128]{1,0:T(1,128)}', space=vmem, size = 0x12000, scoped, tag = 'internal scratch']
  %s0 = inlined_call_operand.vmem [shape: f32[8,128], index: 0, kind: input, shape index: {}]
  %s1 = inlined_call_operand.vmem [shape: f32[128,128], index: 1, kind: input, shape index: {}]
  %s2 = inlined_call_operand.vmem [shape: f32[128,128], index: 2, kind: input, shape index: {}]
  %s3 = inlined_call_operand.vmem [shape: f32[1,128], index: 3, kind: input, shape index: {}]
  %s4 = inlined_call_operand.hbm [shape: f32[8,128], index: 4, kind: output, shape index: {}]
  %s5 = sld [smem:[#allocation0]]
  $region34: #{sparse_linear.1} parent=0
    _
  %s7 = ssub.s32 1, %s5
  %s8 = scalar_select 0, %s7, %s5
  $region1: #{sparse_linear.1} parent=0
    #allocation2 [shape = 'u8[4096]{0}', space=vmem, size = 0x1000, scoped, tag = 'output window, operand 0, single buffered']
    #allocation3 [shape = 's32[1]{0}', space=sflag, size = 0x4, scoped, tag = 'scoped memory for sparse_linear.1']
    %9 = vsyncpa [#allocation3], 0
    // Predicated region
    $region2: #{sparse_linear.1} parent=1 // pred_check
      _
    $region3: #{sparse_linear.1} parent=1 // pred_check_branch
      %11 = sbr.rel (0) target = $region5
    $region4: #{sparse_linear.1} parent=1 // pred_region
      _
    $region5: #{sparse_linear.1} parent=1 // pred_fallthru
      _
    // Predicated region
    $region6: #{sparse_linear.1} parent=1 // pred_check
      _
    $region7: #{sparse_linear.1} parent=1 // pred_check_branch
      %13 = sbr.rel (0) target = $region9
    $region8: #{sparse_linear.1} parent=1 // pred_region
      _
    $region9: #{sparse_linear.1} parent=1 // pred_fallthru
      _
    // Predicated region
    $region10: #{sparse_linear.1} parent=1 // pred_check
      _
    $region11: #{sparse_linear.1} parent=1 // pred_check_branch
      %15 = sbr.rel (0) target = $region13
    $region12: #{sparse_linear.1} parent=1 // pred_region
      _
    $region13: #{sparse_linear.1} parent=1 // pred_fallthru
      _
    // Predicated region
    $region14: #{sparse_linear.1} parent=1 // pred_check
      _
    $region15: #{sparse_linear.1} parent=1 // pred_check_branch
      %17 = sbr.rel (0) target = $region17
    $region16: #{sparse_linear.1} parent=1 // pred_region
      _
    $region17: #{sparse_linear.1} parent=1 // pred_fallthru
      _
    %p18 = scmp.eq.s32.totalorder 0, 0
    // Predicated region
    $region18: #{sparse_linear.1} parent=1 // pred_check
      %p19 = pneg %p18
    $region19: #{sparse_linear.1} parent=1 // pred_check_branch
      %21 = sbr.rel (%p19) target = $region21
    $region20: #{sparse_linear.1} parent=1 // pred_region
      %22 = vst [vmem:[#allocation2] sm:$0xff] 0.0
    $region21: #{sparse_linear.1} parent=1 // pred_fallthru
      _
    %v23 = vld [vmem:[%s1] sm:$0xff]
    %v24 = vld [vmem:[%s1 + $0x8] sm:$0xff]
    %v25 = vld [vmem:[%s1 + $0x10] sm:$0xff]
    %v26 = vld [vmem:[%s1 + $0x18] sm:$0xff]
    %v27 = vld [vmem:[%s1 + $0x20] sm:$0xff]
    %v28 = vld [vmem:[%s1 + $0x28] sm:$0xff]
    %v29 = vld [vmem:[%s1 + $0x30] sm:$0xff]
    %v30 = vld [vmem:[%s1 + $0x38] sm:$0xff]
    %v31 = vld [vmem:[%s1 + $0x40] sm:$0xff]
    %v32 = vld [vmem:[%s1 + $0x48] sm:$0xff]
    %v33 = vld [vmem:[%s1 + $0x50] sm:$0xff]
    %v34 = vld [vmem:[%s1 + $0x58] sm:$0xff]
    %v35 = vld [vmem:[%s1 + $0x60] sm:$0xff]
    %v36 = vld [vmem:[%s1 + $0x68] sm:$0xff]
    %v37 = vld [vmem:[%s1 + $0x70] sm:$0xff]
    %v38 = vld [vmem:[%s1 + $0x78] sm:$0xff]
    %v39 = vld [vmem:[%s2] sm:$0xff]
    %v40 = vld [vmem:[%s2 + $0x8] sm:$0xff]
    %v41 = vld [vmem:[%s2 + $0x10] sm:$0xff]
    %v42 = vld [vmem:[%s2 + $0x18] sm:$0xff]
    %v43 = vld [vmem:[%s2 + $0x20] sm:$0xff]
    %v44 = vld [vmem:[%s2 + $0x28] sm:$0xff]
    %v45 = vld [vmem:[%s2 + $0x30] sm:$0xff]
    %v46 = vld [vmem:[%s2 + $0x38] sm:$0xff]
    %v47 = vld [vmem:[%s2 + $0x40] sm:$0xff]
    %v48 = vld [vmem:[%s2 + $0x48] sm:$0xff]
    %v49 = vld [vmem:[%s2 + $0x50] sm:$0xff]
    %v50 = vld [vmem:[%s2 + $0x58] sm:$0xff]
    %v51 = vld [vmem:[%s2 + $0x60] sm:$0xff]
    %v52 = vld [vmem:[%s2 + $0x68] sm:$0xff]
    %v53 = vld [vmem:[%s2 + $0x70] sm:$0xff]
    %v54 = vld [vmem:[%s2 + $0x78] sm:$0xff]
    %v55 = vmul.f32 %v23, %v39
    %v56 = vmul.f32 %v24, %v40
    %v57 = vmul.f32 %v25, %v41
    %v58 = vmul.f32 %v26, %v42
    %v59 = vmul.f32 %v27, %v43
    %v60 = vmul.f32 %v28, %v44
    %v61 = vmul.f32 %v29, %v45
    %v62 = vmul.f32 %v30, %v46
    %v63 = vmul.f32 %v31, %v47
    %v64 = vmul.f32 %v32, %v48
    %v65 = vmul.f32 %v33, %v49
    %v66 = vmul.f32 %v34, %v50
    %v67 = vmul.f32 %v35, %v51
    %v68 = vmul.f32 %v36, %v52
    %v69 = vmul.f32 %v37, %v53
    %v70 = vmul.f32 %v38, %v54
    %v71 = vld [vmem:[%s0] sm:$0xff]
    %v72 = vld [vmem:[#allocation2] sm:$0xff]
    %73 = vmatprep.subr.mxu0 0.0
    %74 = vmatpush1.xpose.msra.mxu0 %v55
    %75 = vmatprep.subr.mxu0 0.0
    %76 = vmatpush1.xpose.msra.mxu0 %v56
    %77 = vmatprep.subr.mxu0 0.0
    %78 = vmatpush1.xpose.msra.mxu0 %v57
    %79 = vmatprep.subr.mxu0 0.0
    %80 = vmatpush1.xpose.msra.mxu0 %v58
    %81 = vmatprep.subr.mxu0 0.0
    %82 = vmatpush1.xpose.msra.mxu0 %v59
    %83 = vmatprep.subr.mxu0 0.0
    %84 = vmatpush1.xpose.msra.mxu0 %v60
    %85 = vmatprep.subr.mxu0 0.0
    %86 = vmatpush1.xpose.msra.mxu0 %v61
    %87 = vmatprep.subr.mxu0 0.0
    %88 = vmatpush1.xpose.msra.mxu0 %v62
    %89 = vmatprep.subr.mxu0 0.0
    %90 = vmatpush1.xpose.msra.mxu0 %v63
    %91 = vmatprep.subr.mxu0 0.0
    %92 = vmatpush1.xpose.msra.mxu0 %v64
    %93 = vmatprep.subr.mxu0 0.0
    %94 = vmatpush1.xpose.msra.mxu0 %v65
    %95 = vmatprep.subr.mxu0 0.0
    %96 = vmatpush1.xpose.msra.mxu0 %v66
    %97 = vmatprep.subr.mxu0 0.0
    %98 = vmatpush1.xpose.msra.mxu0 %v67
    %99 = vmatprep.subr.mxu0 0.0
    %100 = vmatpush1.xpose.msra.mxu0 %v68
    %101 = vmatprep.subr.mxu0 0.0
    %102 = vmatpush1.xpose.msra.mxu0 %v69
    %103 = vmatprep.subr.mxu0 0.0
    %104 = vmatpush1.xpose.msra.mxu0 %v70
    %105 = vmatprep.subr.mxu0 0.0
    %106 = vmatpush1.xpose.msra.mxu0 0.0
    %107 = vmatprep.subr.mxu0 0.0
    %108 = vmatpush1.xpose.msra.mxu0 0.0
    %109 = vmatprep.subr.mxu0 0.0
    %110 = vmatpush1.xpose.msra.mxu0 0.0
    %111 = vmatprep.subr.mxu0 0.0
    %112 = vmatpush1.xpose.msra.mxu0 0.0
    %113 = vmatprep.subr.mxu0 0.0
    %114 = vmatpush1.xpose.msra.mxu0 0.0
    %115 = vmatprep.subr.mxu0 0.0
    %116 = vmatpush1.xpose.msra.mxu0 0.0
    %117 = vmatprep.subr.mxu0 0.0
    %118 = vmatpush1.xpose.msra.mxu0 0.0
    %119 = vmatprep.subr.mxu0 0.0
    %120 = vmatpush1.xpose.msra.mxu0 0.0
    %121 = vmatprep.subr.mxu0 0.0
    %122 = vmatpush1.xpose.msra.mxu0 0.0
    %123 = vmatprep.subr.mxu0 0.0
    %124 = vmatpush1.xpose.msra.mxu0 0.0
    %125 = vmatprep.subr.mxu0 0.0
    %126 = vmatpush1.xpose.msra.mxu0 0.0
    %127 = vmatprep.subr.mxu0 0.0
    %128 = vmatpush1.xpose.msra.mxu0 0.0
    %129 = vmatprep.subr.mxu0 0.0
    %130 = vmatpush1.xpose.msra.mxu0 0.0
    %131 = vmatprep.subr.mxu0 0.0
    %132 = vmatpush1.xpose.msra.mxu0 0.0
    %133 = vmatprep.subr.mxu0 0.0
    %134 = vmatpush1.xpose.msra.mxu0 0.0
    %135 = vmatprep.subr.mxu0 0.0
    %136 = vmatpush1.xpose.msra.mxu0 0.0
    %137 = vmatprep.mubr.f32.mxu0 0.0
    %138 = vmatmul.mubr.f32.gmra.mrb[0].mxu0 %v71
    %v139 = vpop.f32.mrb[0].mxu0
    %v140 = vadd.f32 0.0, %v139
    %v141 = vpop.f32.mrb[0].mxu0
    %142 = vdwg.mxu0
    %v143 = vadd.f32 %v72, %v140
    %144 = vst [vmem:[#allocation2] sm:$0xff] %v143
    // Predicated region
    $region22: #{sparse_linear.1} parent=1 // pred_check
      %p145 = pneg %p18
    $region23: #{sparse_linear.1} parent=1 // pred_check_branch
      %147 = sbr.rel (%p145) target = $region25
    $region24: #{sparse_linear.1} parent=1 // pred_region
      %v148 = vld [vmem:[#allocation2] sm:$0xff]
      %v149 = vld [vmem:[%s3] sm:$0x1]
      %v151 = vlaneseq
      %v152 = vshrl.u32 %v151, 7
      %v153 = vsub.s32 0, %v152
      %v154 = vrot.slane %v149, %v153
      %v156 = vadd.f32 %v148, %v154
      %157 = vst [vmem:[#allocation2] sm:$0xff] %v156
    $region25: #{sparse_linear.1} parent=1 // pred_fallthru
      _
    // Predicated region
    $region26: #{sparse_linear.1} parent=1 // pred_check
      _
    $region27: #{sparse_linear.1} parent=1 // pred_check_branch
      %159 = sbr.rel (0) target = $region29
    $region28: #{sparse_linear.1} parent=1 // pred_region
      %s161 = ssub.s32 128, 128
      %162 = vsyncadd [#allocation3], %s161
      %s164 = sshll.u32 [#allocation2], 4
      %s165 = int_to_ptr.vmem [resolvable:$true] %s164
      %167 = dma.vmem_to_hbm [thread:$0]  %s165, 128, %s4, [#allocation3]
    $region29: #{sparse_linear.1} parent=1 // pred_fallthru
      _
    // Predicated region
    $region30: #{sparse_linear.1} parent=1 // pred_check
      _
    $region31: #{sparse_linear.1} parent=1 // pred_check_branch
      %169 = sbr.rel (0) target = $region33
    $region32: #{sparse_linear.1} parent=1 // pred_region
      %170 = dma.done [#allocation3], 128
    $region33: #{sparse_linear.1} parent=1 // pred_fallthru
      _
    %171 = vsyncpa [#allocation3], 1

</llo_original>
